<compile_context>
chip_gen: v5e
topology: v5e:2x2
jax: 0.10.0
libtpu: 0.0.40
codegen_flags: <defaults>
</compile_context>

<pallas_src>
import math

import jax
import jax.numpy as jnp
from jax.experimental import pallas as pl
from jax.experimental.pallas import tpu as pltpu


def _mlp_kernel(x_ref, w1_ref, b1_ref, w2_ref, b2_ref, o_ref):
    # fc1: bf16 x bf16 on the MXU, f32 accumulation.
    h = jnp.dot(x_ref[...], w1_ref[...], preferred_element_type=jnp.float32)
    # Bias + ReLU in f32 (keeps the VPU path f32 — friendly on v5e).
    h = jnp.maximum(h + b1_ref[...], 0.0)
    # Dropout: inference-mode identity (PyTorch Dropout is a no-op in eval()).
    # TODO(synk): training-mode dropout would use pltpu.prng_seed/prng_random_bits.
    # fc2 as a lane-dense VPU mul + XLU reduce (N=1 matmul would waste the MXU).
    logit = jnp.sum(h * w2_ref[...], axis=-1, keepdims=True) + b2_ref[0, 0]
    o_ref[...] = jax.nn.sigmoid(logit)


def anomaly_score_classifier(x_nchw, w1, b1, w2, b2):
    """Forward pass of AnomalyScoreClassifier.

    x_nchw : [B, C, H, W] float32
    w1     : [D, H1] bfloat16 (or float32; cast here)   D = C*H*W
    b1     : [1, H1] float32
    w2     : [H1]/[H1,1]/[1,H1] float32 (reshaped to lane-dense [1, H1])
    b2     : scalar-ish float32 (reshaped to [1, 1], lives in SMEM)
    returns: [B, 1] float32 sigmoid scores
    """
    B = x_nchw.shape[0]
    D = math.prod(x_nchw.shape[1:])
    H1 = w1.shape[1]

    # bf16 inputs to the MXU matmul; f32 epilogue operands.
    x = x_nchw.reshape(B, D).astype(jnp.bfloat16)
    w1 = w1.astype(jnp.bfloat16)
    b1 = jnp.asarray(b1, jnp.float32).reshape(1, H1)
    w2 = jnp.asarray(w2, jnp.float32).reshape(1, H1)   # lane-dense row
    b2 = jnp.asarray(b2, jnp.float32).reshape(1, 1)    # SMEM scalar

    # Batch tile: multiple of 8 (sublane), capped at 128 (MXU M rows).
    TM = min(128, max(8, ((B + 7) // 8) * 8))
    Bp = ((B + TM - 1) // TM) * TM
    if Bp != B:
        x = jnp.pad(x, ((0, Bp - B), (0, 0)))

    # NOTE: w1 (bf16) stays fully resident in VMEM across the batch grid.
    # TODO(synk): for very large D (w1 >~ 16 MiB, i.e. v7x 64 MiB VMEM budget
    # minus double-buffering), add a K-tiling "arbitrary" grid axis with an
    # f32 accumulator instead of keeping w1 resident.
    out = pl.pallas_call(
        _mlp_kernel,
        out_shape=jax.ShapeDtypeStruct((Bp, 1), jnp.float32),
        grid_spec=pltpu.PrefetchScalarGridSpec(
            num_scalar_prefetch=0,
            grid=(Bp // TM,),
            in_specs=[
                pl.BlockSpec((TM, D), lambda i: (i, 0)),        # x tile
                pl.BlockSpec((D, H1), lambda i: (0, 0)),        # w1 resident
                pl.BlockSpec((1, H1), lambda i: (0, 0)),        # b1 resident
                pl.BlockSpec((1, H1), lambda i: (0, 0)),        # w2 resident
                pl.BlockSpec(memory_space=pltpu.MemorySpace.SMEM),  # b2 scalar
            ],
            out_specs=pl.BlockSpec((TM, 1), lambda i: (i, 0)),
        ),
        compiler_params=pltpu.CompilerParams(
            dimension_semantics=("parallel",),   # shards batch across v7x's 2 TCs
        ),
    )(x, w1, b1, w2, b2)
    return out[:B]


def init_params(key, input_dim, hidden_dim=256):
    """Parameter init mirroring the module's shapes.

    fc1: Linear(input_dim, hidden_dim), fc2: Linear(hidden_dim, 1),
    biases filled with 0.01 (as in _init_weights).  w1 is stored bf16 so the
    kernel's dominant HBM load is half-width.
    """
    k1, k2 = jax.random.split(key)
    bound1 = 1.0 / jnp.sqrt(input_dim)
    bound2 = 1.0 / jnp.sqrt(hidden_dim)
    w1 = jax.random.uniform(k1, (input_dim, hidden_dim), jnp.float32,
                            minval=-bound1, maxval=bound1).astype(jnp.bfloat16)
    w2 = jax.random.uniform(k2, (hidden_dim,), jnp.float32,
                            minval=-bound2, maxval=bound2)
    b1 = jnp.full((1, hidden_dim), 0.01, jnp.float32)
    b2 = jnp.full((1, 1), 0.01, jnp.float32)
    return w1, b1, w2, b2


if __name__ == "__main__":
    key = jax.random.PRNGKey(0)
    kx, kp = jax.random.split(key)

    B, C, H, W = 2, 4, 16, 16          # input_dim = 4*16*16 = 1024
    hidden_dim = 256
    input_dim = C * H * W

    x = jax.random.normal(kx, (B, C, H, W), jnp.float32)
    w1, b1, w2, b2 = init_params(kp, input_dim, hidden_dim)

    score = anomaly_score_classifier(x, w1, b1, w2, b2)
    score = jax.block_until_ready(score)

    # Pure-JAX reference (f32 math on the same — bf16-quantized — weights).
    xf = x.reshape(B, -1)
    w1_f32 = w1.astype(jnp.float32)
    ref = jax.nn.sigmoid(
        jnp.maximum(xf @ w1_f32 + b1, 0.0) @ w2.reshape(hidden_dim, 1) + b2
    )
    assert score.shape == (B, 1)
    # bf16 fc1 inputs -> loosened tolerance (intentional precision change).
    assert jnp.allclose(score, ref, atol=2e-2, rtol=2e-2), (score, ref)

    print("KERNEL_OK")
</pallas_src>

<mosaic_0001>
module attributes {stable_mosaic.version = 11 : i64} {
  func.func @_mlp_kernel(%arg0: i32, %arg1: memref<8x1024xbf16, #tpu.memory_space<vmem>>, %arg2: memref<1024x256xbf16, #tpu.memory_space<vmem>>, %arg3: memref<1x256xf32, #tpu.memory_space<vmem>>, %arg4: memref<1x256xf32, #tpu.memory_space<vmem>>, %arg5: memref<1x1xf32, #tpu.memory_space<smem>>, %arg6: memref<8x1xf32, #tpu.memory_space<vmem>>) attributes {dimension_semantics = [#tpu.dimension_semantics<parallel>], iteration_bounds = array<i64: 1>, scalar_prefetch = 0 : i64, scratch_operands = 0 : i64, tpu.core_type = #tpu.core_type<tc>, window_params = [{transform_indices = @transform_0, window_bounds = array<i64: 8, 1024>}, {pipeline_mode = #tpu.pipeline_mode<synchronous>, transform_indices = @transform_1, window_bounds = array<i64: 1024, 256>}, {pipeline_mode = #tpu.pipeline_mode<synchronous>, transform_indices = @transform_2, window_bounds = array<i64: 1, 256>}, {pipeline_mode = #tpu.pipeline_mode<synchronous>, transform_indices = @transform_3, window_bounds = array<i64: 1, 256>}, {transform_indices = @transform_4, window_bounds = array<i64: 1, 1>}, {transform_indices = @transform_5, window_bounds = array<i64: 8, 1>}]} {
    %c0 = arith.constant 0 : index
    %c0_0 = arith.constant 0 : index
    %0 = vector.load %arg1[%c0, %c0_0] : memref<8x1024xbf16, #tpu.memory_space<vmem>>, vector<8x1024xbf16>
    %c0_1 = arith.constant 0 : index
    %c0_2 = arith.constant 0 : index
    %1 = vector.load %arg2[%c0_1, %c0_2] : memref<1024x256xbf16, #tpu.memory_space<vmem>>, vector<1024x256xbf16>
    %cst = arith.constant dense<0.000000e+00> : vector<8x256xf32>
    %2 = tpu.matmul %0, %1, %cst {dimension_numbers = #tpu.dot_dimension_numbers<[1], [0], [0], [1], [0, 0, 1, 1], [], []>} : vector<8x1024xbf16>, vector<1024x256xbf16>, vector<8x256xf32> -> vector<8x256xf32>
    %c0_3 = arith.constant 0 : index
    %c0_4 = arith.constant 0 : index
    %3 = vector.load %arg3[%c0_3, %c0_4] : memref<1x256xf32, #tpu.memory_space<vmem>>, vector<1x256xf32>
    %4 = vector.broadcast %3 : vector<1x256xf32> to vector<8x256xf32>
    %5 = arith.addf %2, %4 : vector<8x256xf32>
    %cst_5 = arith.constant 0.000000e+00 : f32
    %6 = vector.broadcast %cst_5 : f32 to vector<8x256xf32>
    %7 = arith.maximumf %5, %6 : vector<8x256xf32>
    %c0_6 = arith.constant 0 : index
    %c0_7 = arith.constant 0 : index
    %8 = vector.load %arg4[%c0_6, %c0_7] : memref<1x256xf32, #tpu.memory_space<vmem>>, vector<1x256xf32>
    %9 = vector.broadcast %8 : vector<1x256xf32> to vector<8x256xf32>
    %10 = arith.mulf %7, %9 : vector<8x256xf32>
    %cst_8 = arith.constant dense<0.000000e+00> : vector<8xf32>
    %11 = vector.multi_reduction <add>, %10, %cst_8 [1] : vector<8x256xf32> to vector<8xf32>
    %12 = vector.shape_cast %11 : vector<8xf32> to vector<8x1xf32>
    %c0_9 = arith.constant 0 : index
    %c0_10 = arith.constant 0 : index
    %13 = memref.load %arg5[%c0_9, %c0_10] : memref<1x1xf32, #tpu.memory_space<smem>>
    %14 = vector.broadcast %13 : f32 to vector<8x1xf32>
    %15 = arith.addf %12, %14 : vector<8x1xf32>
    %16 = arith.negf %15 : vector<8x1xf32>
    %17 = math.exp %16 : vector<8x1xf32>
    %cst_11 = arith.constant 1.000000e+00 : f32
    %18 = vector.broadcast %cst_11 : f32 to vector<8x1xf32>
    %19 = arith.addf %18, %17 : vector<8x1xf32>
    %20 = arith.divf %18, %19 : vector<8x1xf32>
    %c0_12 = arith.constant 0 : index
    %c0_13 = arith.constant 0 : index
    %21 = vector.load %arg6[%c0_12, %c0_13] : memref<8x1xf32, #tpu.memory_space<vmem>>, vector<8x1xf32>
    tpu.vector_store %arg6[%c0_12, %c0_13], %20 {strides = array<i32>} : memref<8x1xf32, #tpu.memory_space<vmem>>, vector<8x1xf32>,
    return
  }
  func.func @transform_0(%arg0: i32) -> (i32, i32) {
    %c0_i32 = arith.constant 0 : i32
    %c0_i32_0 = arith.constant 0 : i32
    return %arg0, %c0_i32 : i32, i32
  }
  func.func @transform_1(%arg0: i32) -> (i32, i32) {
    %c0_i32 = arith.constant 0 : i32
    %c0_i32_0 = arith.constant 0 : i32
    %c0_i32_1 = arith.constant 0 : i32
    return %c0_i32, %c0_i32_0 : i32, i32
  }
  func.func @transform_2(%arg0: i32) -> (i32, i32) {
    %c0_i32 = arith.constant 0 : i32
    %c0_i32_0 = arith.constant 0 : i32
    %c0_i32_1 = arith.constant 0 : i32
    return %c0_i32, %c0_i32_0 : i32, i32
  }
  func.func @transform_3(%arg0: i32) -> (i32, i32) {
    %c0_i32 = arith.constant 0 : i32
    %c0_i32_0 = arith.constant 0 : i32
    %c0_i32_1 = arith.constant 0 : i32
    return %c0_i32, %c0_i32_0 : i32, i32
  }
  func.func @transform_4(%arg0: i32) -> (i32, i32) {
    %c0_i32 = arith.constant 0 : i32
    %c0_i32_0 = arith.constant 0 : i32
    %c0_i32_1 = arith.constant 0 : i32
    return %c0_i32, %c0_i32_0 : i32, i32
  }
  func.func @transform_5(%arg0: i32) -> (i32, i32) {
    %c0_i32 = arith.constant 0 : i32
    %c0_i32_0 = arith.constant 0 : i32
    return %arg0, %c0_i32 : i32, i32
  }
}

</mosaic_0001>

<llo_original>
// kernel: tpu_custom_call.1
$region0: #{tpu_custom_call.1}
  #allocation0 [shape = 'u32[]', space=smem, size = 0x4, offset = 0x4, fixed_abs, tag = 'smem constant byte address 0x4 - core index']
  #allocation1 [shape = 'u32[72,128]{1,0:T(1,128)}', space=vmem, size = 0x9000, scoped, tag = 'internal scratch']
  #allocation2 [shape = 'f32[1,1]{1,0:T(1,128)S(6)}', space=smem, size = 0x200, scoped, tag = 'scoped memory for tpu_custom_call.1']
  %s0 = inlined_call_operand.hbm [shape: bf16[8,1024], index: 0, kind: input, shape index: {}]
  %s1 = inlined_call_operand.hbm [shape: bf16[1024,256], index: 1, kind: input, shape index: {}]
  %s2 = inlined_call_operand.vmem [shape: f32[1,256], index: 2, kind: input, shape index: {}]
  %s3 = inlined_call_operand.vmem [shape: f32[1,256], index: 3, kind: input, shape index: {}]
  %s4 = inlined_call_operand.<no memory space> [shape: f32[1,1], index: 4, kind: input, shape index: {}]
  %s5 = inlined_call_operand.vmem [shape: f32[8,1], index: 5, kind: output, shape index: {}]
  %s6 = sld [smem:[#allocation0]]
  $region38: #{tpu_custom_call.1} parent=0
    _
  %s8 = ssub.s32 1, %s6
  %s9 = scalar_select 0, %s8, %s6
  %10 = sst [smem:[#allocation2]] %s4
  $region1: #{tpu_custom_call.1} parent=0
    #allocation3 [shape = 'u8[16384]{0}', space=vmem, size = 0x4000, scoped, tag = 'input window, operand 0, single buffered']
    #allocation4 [shape = 's32[1]{0}', space=sflag, size = 0x4, scoped, tag = 'scoped memory for tpu_custom_call.1']
    #allocation5 [shape = 'u8[524288]{0}', space=vmem, size = 0x80000, scoped, tag = 'input window, operand 1, single buffered']
    #allocation6 [shape = 's32[1]{0}', space=sflag, size = 0x4, scoped, tag = 'scoped memory for tpu_custom_call.1']
    %11 = vsyncpa [#allocation4], 0
    %12 = vsyncpa [#allocation6], 0
    // Predicated region
    $region2: #{tpu_custom_call.1} parent=1 // pred_check
      _
    $region3: #{tpu_custom_call.1} parent=1 // pred_check_branch
      %14 = sbr.rel (0) target = $region5
    $region4: #{tpu_custom_call.1} parent=1 // pred_region
      %16 = vsyncadd [#allocation4], 0
      %s18 = sshll.u32 %s0, 4
      %s19 = int_to_ptr.hbm [resolvable:$true] %s18
      %s20 = sshll.u32 [#allocation3], 4
      %s21 = int_to_ptr.vmem [resolvable:$true] %s20
      %23 = dma.hbm_to_vmem [thread:$0]  %s19, 512, %s21, [#allocation4]
    $region5: #{tpu_custom_call.1} parent=1 // pred_fallthru
      _
    // Predicated region
    $region6: #{tpu_custom_call.1} parent=1 // pred_check
      _
    $region7: #{tpu_custom_call.1} parent=1 // pred_check_branch
      %25 = sbr.rel (0) target = $region9
    $region8: #{tpu_custom_call.1} parent=1 // pred_region
      %27 = vsyncadd [#allocation6], 0
      %s28 = sshll.u32 %s1, 4
      %s29 = int_to_ptr.hbm [resolvable:$true] %s28
      %s30 = sshll.u32 [#allocation5], 4
      %s31 = int_to_ptr.vmem [resolvable:$true] %s30
      %36 = dma.hbm_to_vmem [thread:$0]  %s29, 16384, %s31, [#allocation6], 128, 128, 8
    $region9: #{tpu_custom_call.1} parent=1 // pred_fallthru
      _
    // Predicated region
    $region10: #{tpu_custom_call.1} parent=1 // pred_check
      _
    $region11: #{tpu_custom_call.1} parent=1 // pred_check_branch
      %38 = sbr.rel (0) target = $region13
    $region12: #{tpu_custom_call.1} parent=1 // pred_region
      _
    $region13: #{tpu_custom_call.1} parent=1 // pred_fallthru
      _
    // Predicated region
    $region14: #{tpu_custom_call.1} parent=1 // pred_check
      _
    $region15: #{tpu_custom_call.1} parent=1 // pred_check_branch
      %40 = sbr.rel (0) target = $region17
    $region16: #{tpu_custom_call.1} parent=1 // pred_region
      _
    $region17: #{tpu_custom_call.1} parent=1 // pred_fallthru
      _
    // Predicated region
    $region18: #{tpu_custom_call.1} parent=1 // pred_check
      _
    $region19: #{tpu_custom_call.1} parent=1 // pred_check_branch
      %42 = sbr.rel (0) target = $region21
    $region20: #{tpu_custom_call.1} parent=1 // pred_region
      _
    $region21: #{tpu_custom_call.1} parent=1 // pred_fallthru
      _
    // Predicated region
    $region22: #{tpu_custom_call.1} parent=1 // pred_check
      _
    $region23: #{tpu_custom_call.1} parent=1 // pred_check_branch
      %44 = sbr.rel (0) target = $region25
    $region24: #{tpu_custom_call.1} parent=1 // pred_region
      %46 = dma.done [#allocation4], 512
    $region25: #{tpu_custom_call.1} parent=1 // pred_fallthru
      _
    // Predicated region
    $region26: #{tpu_custom_call.1} parent=1 // pred_check
      _
    $region27: #{tpu_custom_call.1} parent=1 // pred_check_branch
      %48 = sbr.rel (0) target = $region29
    $region28: #{tpu_custom_call.1} parent=1 // pred_region
      %50 = dma.done [#allocation6], 16384
    $region29: #{tpu_custom_call.1} parent=1 // pred_fallthru
      _
    %v51 = vld [vmem:[#allocation3] sm:$0xff]
    %v52 = vld [vmem:[#allocation3 + $0x8] sm:$0xff]
    %v53 = vld [vmem:[#allocation3 + $0x10] sm:$0xff]
    %v54 = vld [vmem:[#allocation3 + $0x18] sm:$0xff]
    %v55 = vld [vmem:[#allocation5] sm:$0xff]
    %v56 = vld [vmem:[#allocation5 + $0x8] sm:$0xff]
    %v57 = vld [vmem:[#allocation5 + $0x10] sm:$0xff]
    %v58 = vld [vmem:[#allocation5 + $0x18] sm:$0xff]
    %v59 = vld [vmem:[#allocation5 + $0x20] sm:$0xff]
    %v60 = vld [vmem:[#allocation5 + $0x28] sm:$0xff]
    %v61 = vld [vmem:[#allocation5 + $0x30] sm:$0xff]
    %v62 = vld [vmem:[#allocation5 + $0x38] sm:$0xff]
    %v63 = vld [vmem:[#allocation5 + $0x40] sm:$0xff]
    %v64 = vld [vmem:[#allocation5 + $0x48] sm:$0xff]
    %v65 = vld [vmem:[#allocation5 + $0x50] sm:$0xff]
    %v66 = vld [vmem:[#allocation5 + $0x58] sm:$0xff]
    %v67 = vld [vmem:[#allocation5 + $0x60] sm:$0xff]
    %v68 = vld [vmem:[#allocation5 + $0x68] sm:$0xff]
    %v69 = vld [vmem:[#allocation5 + $0x70] sm:$0xff]
    %v70 = vld [vmem:[#allocation5 + $0x78] sm:$0xff]
    %v71 = vld [vmem:[#allocation5 + $0x80] sm:$0xff]
    %v72 = vld [vmem:[#allocation5 + $0x88] sm:$0xff]
    %v73 = vld [vmem:[#allocation5 + $0x90] sm:$0xff]
    %v74 = vld [vmem:[#allocation5 + $0x98] sm:$0xff]
    %v75 = vld [vmem:[#allocation5 + $0xa0] sm:$0xff]
    %v76 = vld [vmem:[#allocation5 + $0xa8] sm:$0xff]
    %v77 = vld [vmem:[#allocation5 + $0xb0] sm:$0xff]
    %v78 = vld [vmem:[#allocation5 + $0xb8] sm:$0xff]
    %v79 = vld [vmem:[#allocation5 + $0xc0] sm:$0xff]
    %v80 = vld [vmem:[#allocation5 + $0xc8] sm:$0xff]
    %v81 = vld [vmem:[#allocation5 + $0xd0] sm:$0xff]
    %v82 = vld [vmem:[#allocation5 + $0xd8] sm:$0xff]
    %v83 = vld [vmem:[#allocation5 + $0xe0] sm:$0xff]
    %v84 = vld [vmem:[#allocation5 + $0xe8] sm:$0xff]
    %v85 = vld [vmem:[#allocation5 + $0xf0] sm:$0xff]
    %v86 = vld [vmem:[#allocation5 + $0xf8] sm:$0xff]
    %v87 = vld [vmem:[#allocation5 + $0x100] sm:$0xff]
    %v88 = vld [vmem:[#allocation5 + $0x108] sm:$0xff]
    %v89 = vld [vmem:[#allocation5 + $0x110] sm:$0xff]
    %v90 = vld [vmem:[#allocation5 + $0x118] sm:$0xff]
    %v91 = vld [vmem:[#allocation5 + $0x120] sm:$0xff]
    %v92 = vld [vmem:[#allocation5 + $0x128] sm:$0xff]
    %v93 = vld [vmem:[#allocation5 + $0x130] sm:$0xff]
    %v94 = vld [vmem:[#allocation5 + $0x138] sm:$0xff]
    %v95 = vld [vmem:[#allocation5 + $0x140] sm:$0xff]
    %v96 = vld [vmem:[#allocation5 + $0x148] sm:$0xff]
    %v97 = vld [vmem:[#allocation5 + $0x150] sm:$0xff]
    %v98 = vld [vmem:[#allocation5 + $0x158] sm:$0xff]
    %v99 = vld [vmem:[#allocation5 + $0x160] sm:$0xff]
    %v100 = vld [vmem:[#allocation5 + $0x168] sm:$0xff]
    %v101 = vld [vmem:[#allocation5 + $0x170] sm:$0xff]
    %v102 = vld [vmem:[#allocation5 + $0x178] sm:$0xff]
    %v103 = vld [vmem:[#allocation5 + $0x180] sm:$0xff]
    %v104 = vld [vmem:[#allocation5 + $0x188] sm:$0xff]
    %v105 = vld [vmem:[#allocation5 + $0x190] sm:$0xff]
    %v106 = vld [vmem:[#allocation5 + $0x198] sm:$0xff]
    %v107 = vld [vmem:[#allocation5 + $0x1a0] sm:$0xff]
    %v108 = vld [vmem:[#allocation5 + $0x1a8] sm:$0xff]
    %v109 = vld [vmem:[#allocation5 + $0x1b0] sm:$0xff]
    %v110 = vld [vmem:[#allocation5 + $0x1b8] sm:$0xff]
    %v111 = vld [vmem:[#allocation5 + $0x1c0] sm:$0xff]
    %v112 = vld [vmem:[#allocation5 + $0x1c8] sm:$0xff]
    %v113 = vld [vmem:[#allocation5 + $0x1d0] sm:$0xff]
    %v114 = vld [vmem:[#allocation5 + $0x1d8] sm:$0xff]
    %v115 = vld [vmem:[#allocation5 + $0x1e0] sm:$0xff]
    %v116 = vld [vmem:[#allocation5 + $0x1e8] sm:$0xff]
    %v117 = vld [vmem:[#allocation5 + $0x1f0] sm:$0xff]
    %v118 = vld [vmem:[#allocation5 + $0x1f8] sm:$0xff]
    %v119 = vld [vmem:[#allocation5 + $0x200] sm:$0xff]
    %v120 = vld [vmem:[#allocation5 + $0x208] sm:$0xff]
    %v121 = vld [vmem:[#allocation5 + $0x210] sm:$0xff]
    %v122 = vld [vmem:[#allocation5 + $0x218] sm:$0xff]
    %v123 = vld [vmem:[#allocation5 + $0x220] sm:$0xff]
    %v124 = vld [vmem:[#allocation5 + $0x228] sm:$0xff]
    %v125 = vld [vmem:[#allocation5 + $0x230] sm:$0xff]
    %v126 = vld [vmem:[#allocation5 + $0x238] sm:$0xff]
    %v127 = vld [vmem:[#allocation5 + $0x240] sm:$0xff]
    %v128 = vld [vmem:[#allocation5 + $0x248] sm:$0xff]
    %v129 = vld [vmem:[#allocation5 + $0x250] sm:$0xff]
    %v130 = vld [vmem:[#allocation5 + $0x258] sm:$0xff]
    %v131 = vld [vmem:[#allocation5 + $0x260] sm:$0xff]
    %v132 = vld [vmem:[#allocation5 + $0x268] sm:$0xff]
    %v133 = vld [vmem:[#allocation5 + $0x270] sm:$0xff]
    %v134 = vld [vmem:[#allocation5 + $0x278] sm:$0xff]
    %v135 = vld [vmem:[#allocation5 + $0x280] sm:$0xff]
    %v136 = vld [vmem:[#allocation5 + $0x288] sm:$0xff]
    %v137 = vld [vmem:[#allocation5 + $0x290] sm:$0xff]
    %v138 = vld [vmem:[#allocation5 + $0x298] sm:$0xff]
    %v139 = vld [vmem:[#allocation5 + $0x2a0] sm:$0xff]
    %v140 = vld [vmem:[#allocation5 + $0x2a8] sm:$0xff]
    %v141 = vld [vmem:[#allocation5 + $0x2b0] sm:$0xff]
    %v142 = vld [vmem:[#allocation5 + $0x2b8] sm:$0xff]
    %v143 = vld [vmem:[#allocation5 + $0x2c0] sm:$0xff]
    %v144 = vld [vmem:[#allocation5 + $0x2c8] sm:$0xff]
    %v145 = vld [vmem:[#allocation5 + $0x2d0] sm:$0xff]
    %v146 = vld [vmem:[#allocation5 + $0x2d8] sm:$0xff]
    %v147 = vld [vmem:[#allocation5 + $0x2e0] sm:$0xff]
    %v148 = vld [vmem:[#allocation5 + $0x2e8] sm:$0xff]
    %v149 = vld [vmem:[#allocation5 + $0x2f0] sm:$0xff]
    %v150 = vld [vmem:[#allocation5 + $0x2f8] sm:$0xff]
    %v151 = vld [vmem:[#allocation5 + $0x300] sm:$0xff]
    %v152 = vld [vmem:[#allocation5 + $0x308] sm:$0xff]
    %v153 = vld [vmem:[#allocation5 + $0x310] sm:$0xff]
    %v154 = vld [vmem:[#allocation5 + $0x318] sm:$0xff]
    %v155 = vld [vmem:[#allocation5 + $0x320] sm:$0xff]
    %v156 = vld [vmem:[#allocation5 + $0x328] sm:$0xff]
    %v157 = vld [vmem:[#allocation5 + $0x330] sm:$0xff]
    %v158 = vld [vmem:[#allocation5 + $0x338] sm:$0xff]
    %v159 = vld [vmem:[#allocation5 + $0x340] sm:$0xff]
    %v160 = vld [vmem:[#allocation5 + $0x348] sm:$0xff]
    %v161 = vld [vmem:[#allocation5 + $0x350] sm:$0xff]
    %v162 = vld [vmem:[#allocation5 + $0x358] sm:$0xff]
    %v163 = vld [vmem:[#allocation5 + $0x360] sm:$0xff]
    %v164 = vld [vmem:[#allocation5 + $0x368] sm:$0xff]
    %v165 = vld [vmem:[#allocation5 + $0x370] sm:$0xff]
    %v166 = vld [vmem:[#allocation5 + $0x378] sm:$0xff]
    %v167 = vld [vmem:[#allocation5 + $0x380] sm:$0xff]
    %v168 = vld [vmem:[#allocation5 + $0x388] sm:$0xff]
    %v169 = vld [vmem:[#allocation5 + $0x390] sm:$0xff]
    %v170 = vld [vmem:[#allocation5 + $0x398] sm:$0xff]
    %v171 = vld [vmem:[#allocation5 + $0x3a0] sm:$0xff]
    %v172 = vld [vmem:[#allocation5 + $0x3a8] sm:$0xff]
    %v173 = vld [vmem:[#allocation5 + $0x3b0] sm:$0xff]
    %v174 = vld [vmem:[#allocation5 + $0x3b8] sm:$0xff]
    %v175 = vld [vmem:[#allocation5 + $0x3c0] sm:$0xff]
    %v176 = vld [vmem:[#allocation5 + $0x3c8] sm:$0xff]
    %v177 = vld [vmem:[#allocation5 + $0x3d0] sm:$0xff]
    %v178 = vld [vmem:[#allocation5 + $0x3d8] sm:$0xff]
    %v179 = vld [vmem:[#allocation5 + $0x3e0] sm:$0xff]
    %v180 = vld [vmem:[#allocation5 + $0x3e8] sm:$0xff]
    %v181 = vld [vmem:[#allocation5 + $0x3f0] sm:$0xff]
    %v182 = vld [vmem:[#allocation5 + $0x3f8] sm:$0xff]
    %v183 = vld [vmem:[%s2] sm:$0x3]
    %v185 = vperm.slane %v183, 0
    %v186 = vperm.slane %v183, 1
    %v193 = vunpack.c.l.b16 %v51
    %v194 = vunpack.c.h.b16 %v51
    %v195 = vunpack.c.l.b16 %v52
    %v196 = vunpack.c.h.b16 %v52
    %v197 = vunpack.c.l.b16 %v53
    %v198 = vunpack.c.h.b16 %v53
    %v199 = vunpack.c.l.b16 %v54
    %v200 = vunpack.c.h.b16 %v54
    %v201 = vpack.c.b16 %v193, %v193
    %v202 = vpack.c.b16 %v194, %v194
    %v203 = vpack.c.b16 %v195, %v195
    %v204 = vpack.c.b16 %v196, %v196
    %v205 = vpack.c.b16 %v197, %v197
    %v206 = vpack.c.b16 %v198, %v198
    %v207 = vpack.c.b16 %v199, %v199
    %v208 = vpack.c.b16 %v200, %v200
    %v345 = vunpack.c.l.b16 %v55
    %v346 = vunpack.c.h.b16 %v55
    %v347 = vunpack.c.l.b16 %v56
    %v348 = vunpack.c.h.b16 %v56
    %v349 = vunpack.c.l.b16 %v57
    %v350 = vunpack.c.h.b16 %v57
    %v351 = vunpack.c.l.b16 %v58
    %v352 = vunpack.c.h.b16 %v58
    %v353 = vunpack.c.l.b16 %v59
    %v354 = vunpack.c.h.b16 %v59
    %v355 = vunpack.c.l.b16 %v60
    %v356 = vunpack.c.h.b16 %v60
    %v357 = vunpack.c.l.b16 %v61
    %v358 = vunpack.c.h.b16 %v61
    %v359 = vunpack.c.l.b16 %v62
    %v360 = vunpack.c.h.b16 %v62
    %v361 = vunpack.c.l.b16 %v63
    %v362 = vunpack.c.h.b16 %v63
    %v363 = vunpack.c.l.b16 %v64
    %v364 = vunpack.c.h.b16 %v64
    %v365 = vunpack.c.l.b16 %v65
    %v366 = vunpack.c.h.b16 %v65
    %v367 = vunpack.c.l.b16 %v66
    %v368 = vunpack.c.h.b16 %v66
    %v369 = vunpack.c.l.b16 %v67
    %v370 = vunpack.c.h.b16 %v67
    %v371 = vunpack.c.l.b16 %v68
    %v372 = vunpack.c.h.b16 %v68
    %v373 = vunpack.c.l.b16 %v69
    %v374 = vunpack.c.h.b16 %v69
    %v375 = vunpack.c.l.b16 %v70
    %v376 = vunpack.c.h.b16 %v70
    %v377 = vunpack.c.l.b16 %v71
    %v378 = vunpack.c.h.b16 %v71
    %v379 = vunpack.c.l.b16 %v72
    %v380 = vunpack.c.h.b16 %v72
    %v381 = vunpack.c.l.b16 %v73
    %v382 = vunpack.c.h.b16 %v73
    %v383 = vunpack.c.l.b16 %v74
    %v384 = vunpack.c.h.b16 %v74
    %v385 = vunpack.c.l.b16 %v75
    %v386 = vunpack.c.h.b16 %v75
    %v387 = vunpack.c.l.b16 %v76
    %v388 = vunpack.c.h.b16 %v76
    %v389 = vunpack.c.l.b16 %v77
    %v390 = vunpack.c.h.b16 %v77
    %v391 = vunpack.c.l.b16 %v78
    %v392 = vunpack.c.h.b16 %v78
    %v393 = vunpack.c.l.b16 %v79
    %v394 = vunpack.c.h.b16 %v79
    %v395 = vunpack.c.l.b16 %v80
    %v396 = vunpack.c.h.b16 %v80
    %v397 = vunpack.c.l.b16 %v81
    %v398 = vunpack.c.h.b16 %v81
    %v399 = vunpack.c.l.b16 %v82
    %v400 = vunpack.c.h.b16 %v82
    %v401 = vunpack.c.l.b16 %v83
    %v402 = vunpack.c.h.b16 %v83
    %v403 = vunpack.c.l.b16 %v84
    %v404 = vunpack.c.h.b16 %v84
    %v405 = vunpack.c.l.b16 %v85
    %v406 = vunpack.c.h.b16 %v85
    %v407 = vunpack.c.l.b16 %v86
    %v408 = vunpack.c.h.b16 %v86
    %v409 = vunpack.c.l.b16 %v87
    %v410 = vunpack.c.h.b16 %v87
    %v411 = vunpack.c.l.b16 %v88
    %v412 = vunpack.c.h.b16 %v88
    %v413 = vunpack.c.l.b16 %v89
    %v414 = vunpack.c.h.b16 %v89
    %v415 = vunpack.c.l.b16 %v90
    %v416 = vunpack.c.h.b16 %v90
    %v417 = vunpack.c.l.b16 %v91
    %v418 = vunpack.c.h.b16 %v91
    %v419 = vunpack.c.l.b16 %v92
    %v420 = vunpack.c.h.b16 %v92
    %v421 = vunpack.c.l.b16 %v93
    %v422 = vunpack.c.h.b16 %v93
    %v423 = vunpack.c.l.b16 %v94
    %v424 = vunpack.c.h.b16 %v94
    %v425 = vunpack.c.l.b16 %v95
    %v426 = vunpack.c.h.b16 %v95
    %v427 = vunpack.c.l.b16 %v96
    %v428 = vunpack.c.h.b16 %v96
    %v429 = vunpack.c.l.b16 %v97
    %v430 = vunpack.c.h.b16 %v97
    %v431 = vunpack.c.l.b16 %v98
    %v432 = vunpack.c.h.b16 %v98
    %v433 = vunpack.c.l.b16 %v99
    %v434 = vunpack.c.h.b16 %v99
    %v435 = vunpack.c.l.b16 %v100
    %v436 = vunpack.c.h.b16 %v100
    %v437 = vunpack.c.l.b16 %v101
    %v438 = vunpack.c.h.b16 %v101
    %v439 = vunpack.c.l.b16 %v102
    %v440 = vunpack.c.h.b16 %v102
    %v441 = vunpack.c.l.b16 %v103
    %v442 = vunpack.c.h.b16 %v103
    %v443 = vunpack.c.l.b16 %v104
    %v444 = vunpack.c.h.b16 %v104
    %v445 = vunpack.c.l.b16 %v105
    %v446 = vunpack.c.h.b16 %v105
    %v447 = vunpack.c.l.b16 %v106
    %v448 = vunpack.c.h.b16 %v106
    %v449 = vunpack.c.l.b16 %v107
    %v450 = vunpack.c.h.b16 %v107
    %v451 = vunpack.c.l.b16 %v108
    %v452 = vunpack.c.h.b16 %v108
    %v453 = vunpack.c.l.b16 %v109
    %v454 = vunpack.c.h.b16 %v109
    %v455 = vunpack.c.l.b16 %v110
    %v456 = vunpack.c.h.b16 %v110
    %v457 = vunpack.c.l.b16 %v111
    %v458 = vunpack.c.h.b16 %v111
    %v459 = vunpack.c.l.b16 %v112
    %v460 = vunpack.c.h.b16 %v112
    %v461 = vunpack.c.l.b16 %v113
    %v462 = vunpack.c.h.b16 %v113
    %v463 = vunpack.c.l.b16 %v114
    %v464 = vunpack.c.h.b16 %v114
    %v465 = vunpack.c.l.b16 %v115
    %v466 = vunpack.c.h.b16 %v115
    %v467 = vunpack.c.l.b16 %v116
    %v468 = vunpack.c.h.b16 %v116
    %v469 = vunpack.c.l.b16 %v117
    %v470 = vunpack.c.h.b16 %v117
    %v471 = vunpack.c.l.b16 %v118
    %v472 = vunpack.c.h.b16 %v118
    %v473 = vunpack.c.l.b16 %v119
    %v474 = vunpack.c.h.b16 %v119
    %v475 = vunpack.c.l.b16 %v120
    %v476 = vunpack.c.h.b16 %v120
    %v477 = vunpack.c.l.b16 %v121
    %v478 = vunpack.c.h.b16 %v121
    %v479 = vunpack.c.l.b16 %v122
    %v480 = vunpack.c.h.b16 %v122
    %v481 = vunpack.c.l.b16 %v123
    %v482 = vunpack.c.h.b16 %v123
    %v483 = vunpack.c.l.b16 %v124
    %v484 = vunpack.c.h.b16 %v124
    %v485 = vunpack.c.l.b16 %v125
    %v486 = vunpack.c.h.b16 %v125
    %v487 = vunpack.c.l.b16 %v126
    %v488 = vunpack.c.h.b16 %v126
    %v489 = vunpack.c.l.b16 %v127
    %v490 = vunpack.c.h.b16 %v127
    %v491 = vunpack.c.l.b16 %v128
    %v492 = vunpack.c.h.b16 %v128
    %v493 = vunpack.c.l.b16 %v129
    %v494 = vunpack.c.h.b16 %v129
    %v495 = vunpack.c.l.b16 %v130
    %v496 = vunpack.c.h.b16 %v130
    %v497 = vunpack.c.l.b16 %v131
    %v498 = vunpack.c.h.b16 %v131
    %v499 = vunpack.c.l.b16 %v132
    %v500 = vunpack.c.h.b16 %v132
    %v501 = vunpack.c.l.b16 %v133
    %v502 = vunpack.c.h.b16 %v133
    %v503 = vunpack.c.l.b16 %v134
    %v504 = vunpack.c.h.b16 %v134
    %v505 = vunpack.c.l.b16 %v135
    %v506 = vunpack.c.h.b16 %v135
    %v507 = vunpack.c.l.b16 %v136
    %v508 = vunpack.c.h.b16 %v136
    %v509 = vunpack.c.l.b16 %v137
    %v510 = vunpack.c.h.b16 %v137
    %v511 = vunpack.c.l.b16 %v138
    %v512 = vunpack.c.h.b16 %v138
    %v513 = vunpack.c.l.b16 %v139
    %v514 = vunpack.c.h.b16 %v139
    %v515 = vunpack.c.l.b16 %v140
    %v516 = vunpack.c.h.b16 %v140
    %v517 = vunpack.c.l.b16 %v141
    %v518 = vunpack.c.h.b16 %v141
    %v519 = vunpack.c.l.b16 %v142
    %v520 = vunpack.c.h.b16 %v142
    %v521 = vunpack.c.l.b16 %v143
    %v522 = vunpack.c.h.b16 %v143
    %v523 = vunpack.c.l.b16 %v144
    %v524 = vunpack.c.h.b16 %v144
    %v525 = vunpack.c.l.b16 %v145
    %v526 = vunpack.c.h.b16 %v145
    %v527 = vunpack.c.l.b16 %v146
    %v528 = vunpack.c.h.b16 %v146
    %v529 = vunpack.c.l.b16 %v147
    %v530 = vunpack.c.h.b16 %v147
    %v531 = vunpack.c.l.b16 %v148
    %v532 = vunpack.c.h.b16 %v148
    %v533 = vunpack.c.l.b16 %v149
    %v534 = vunpack.c.h.b16 %v149
    %v535 = vunpack.c.l.b16 %v150
    %v536 = vunpack.c.h.b16 %v150
    %v537 = vunpack.c.l.b16 %v151
    %v538 = vunpack.c.h.b16 %v151
    %v539 = vunpack.c.l.b16 %v152
    %v540 = vunpack.c.h.b16 %v152
    %v541 = vunpack.c.l.b16 %v153
    %v542 = vunpack.c.h.b16 %v153
    %v543 = vunpack.c.l.b16 %v154
    %v544 = vunpack.c.h.b16 %v154
    %v545 = vunpack.c.l.b16 %v155
    %v546 = vunpack.c.h.b16 %v155
    %v547 = vunpack.c.l.b16 %v156
    %v548 = vunpack.c.h.b16 %v156
    %v549 = vunpack.c.l.b16 %v157
    %v550 = vunpack.c.h.b16 %v157
    %v551 = vunpack.c.l.b16 %v158
    %v552 = vunpack.c.h.b16 %v158
    %v553 = vunpack.c.l.b16 %v159
    %v554 = vunpack.c.h.b16 %v159
    %v555 = vunpack.c.l.b16 %v160
    %v556 = vunpack.c.h.b16 %v160
    %v557 = vunpack.c.l.b16 %v161
    %v558 = vunpack.c.h.b16 %v161
    %v559 = vunpack.c.l.b16 %v162
    %v560 = vunpack.c.h.b16 %v162
    %v561 = vunpack.c.l.b16 %v163
    %v562 = vunpack.c.h.b16 %v163
    %v563 = vunpack.c.l.b16 %v164
    %v564 = vunpack.c.h.b16 %v164
    %v565 = vunpack.c.l.b16 %v165
    %v566 = vunpack.c.h.b16 %v165
    %v567 = vunpack.c.l.b16 %v166
    %v568 = vunpack.c.h.b16 %v166
    %v569 = vunpack.c.l.b16 %v167
    %v570 = vunpack.c.h.b16 %v167
    %v571 = vunpack.c.l.b16 %v168
    %v572 = vunpack.c.h.b16 %v168
    %v573 = vunpack.c.l.b16 %v169
    %v574 = vunpack.c.h.b16 %v169
    %v575 = vunpack.c.l.b16 %v170
    %v576 = vunpack.c.h.b16 %v170
    %v577 = vunpack.c.l.b16 %v171
    %v578 = vunpack.c.h.b16 %v171
    %v579 = vunpack.c.l.b16 %v172
    %v580 = vunpack.c.h.b16 %v172
    %v581 = vunpack.c.l.b16 %v173
    %v582 = vunpack.c.h.b16 %v173
    %v583 = vunpack.c.l.b16 %v174
    %v584 = vunpack.c.h.b16 %v174
    %v585 = vunpack.c.l.b16 %v175
    %v586 = vunpack.c.h.b16 %v175
    %v587 = vunpack.c.l.b16 %v176
    %v588 = vunpack.c.h.b16 %v176
    %v589 = vunpack.c.l.b16 %v177
    %v590 = vunpack.c.h.b16 %v177
    %v591 = vunpack.c.l.b16 %v178
    %v592 = vunpack.c.h.b16 %v178
    %v593 = vunpack.c.l.b16 %v179
    %v594 = vunpack.c.h.b16 %v179
    %v595 = vunpack.c.l.b16 %v180
    %v596 = vunpack.c.h.b16 %v180
    %v597 = vunpack.c.l.b16 %v181
    %v598 = vunpack.c.h.b16 %v181
    %v599 = vunpack.c.l.b16 %v182
    %v600 = vunpack.c.h.b16 %v182
    %v601 = vpack.c.b16 %v347, %v345
    %v602 = vpack.c.b16 %v348, %v346
    %v603 = vpack.c.b16 %v351, %v349
    %v604 = vpack.c.b16 %v352, %v350
    %v605 = vpack.c.b16 %v355, %v353
    %v606 = vpack.c.b16 %v356, %v354
    %v607 = vpack.c.b16 %v359, %v357
    %v608 = vpack.c.b16 %v360, %v358
    %v609 = vpack.c.b16 %v363, %v361
    %v610 = vpack.c.b16 %v364, %v362
    %v611 = vpack.c.b16 %v367, %v365
    %v612 = vpack.c.b16 %v368, %v366
    %v613 = vpack.c.b16 %v371, %v369
    %v614 = vpack.c.b16 %v372, %v370
    %v615 = vpack.c.b16 %v375, %v373
    %v616 = vpack.c.b16 %v376, %v374
    %v617 = vpack.c.b16 %v379, %v377
    %v618 = vpack.c.b16 %v380, %v378
    %v619 = vpack.c.b16 %v383, %v381
    %v620 = vpack.c.b16 %v384, %v382
    %v621 = vpack.c.b16 %v387, %v385
    %v622 = vpack.c.b16 %v388, %v386
    %v623 = vpack.c.b16 %v391, %v389
    %v624 = vpack.c.b16 %v392, %v390
    %v625 = vpack.c.b16 %v395, %v393
    %v626 = vpack.c.b16 %v396, %v394
    %v627 = vpack.c.b16 %v399, %v397
    %v628 = vpack.c.b16 %v400, %v398
    %v629 = vpack.c.b16 %v403, %v401
    %v630 = vpack.c.b16 %v404, %v402
    %v631 = vpack.c.b16 %v407, %v405
    %v632 = vpack.c.b16 %v408, %v406
    %v633 = vpack.c.b16 %v411, %v409
    %v634 = vpack.c.b16 %v412, %v410
    %v635 = vpack.c.b16 %v415, %v413
    %v636 = vpack.c.b16 %v416, %v414
    %v637 = vpack.c.b16 %v419, %v417
    %v638 = vpack.c.b16 %v420, %v418
    %v639 = vpack.c.b16 %v423, %v421
    %v640 = vpack.c.b16 %v424, %v422
    %v641 = vpack.c.b16 %v427, %v425
    %v642 = vpack.c.b16 %v428, %v426
    %v643 = vpack.c.b16 %v431, %v429
    %v644 = vpack.c.b16 %v432, %v430
    %v645 = vpack.c.b16 %v435, %v433
    %v646 = vpack.c.b16 %v436, %v434
    %v647 = vpack.c.b16 %v439, %v437
    %v648 = vpack.c.b16 %v440, %v438
    %v649 = vpack.c.b16 %v443, %v441
    %v650 = vpack.c.b16 %v444, %v442
    %v651 = vpack.c.b16 %v447, %v445
    %v652 = vpack.c.b16 %v448, %v446
    %v653 = vpack.c.b16 %v451, %v449
    %v654 = vpack.c.b16 %v452, %v450
    %v655 = vpack.c.b16 %v455, %v453
    %v656 = vpack.c.b16 %v456, %v454
    %v657 = vpack.c.b16 %v459, %v457
    %v658 = vpack.c.b16 %v460, %v458
    %v659 = vpack.c.b16 %v463, %v461
    %v660 = vpack.c.b16 %v464, %v462
    %v661 = vpack.c.b16 %v467, %v465
    %v662 = vpack.c.b16 %v468, %v466
    %v663 = vpack.c.b16 %v471, %v469
    %v664 = vpack.c.b16 %v472, %v470
    %v665 = vpack.c.b16 %v475, %v473
    %v666 = vpack.c.b16 %v476, %v474
    %v667 = vpack.c.b16 %v479, %v477
    %v668 = vpack.c.b16 %v480, %v478
    %v669 = vpack.c.b16 %v483, %v481
    %v670 = vpack.c.b16 %v484, %v482
    %v671 = vpack.c.b16 %v487, %v485
    %v672 = vpack.c.b16 %v488, %v486
    %v673 = vpack.c.b16 %v491, %v489
    %v674 = vpack.c.b16 %v492, %v490
    %v675 = vpack.c.b16 %v495, %v493
    %v676 = vpack.c.b16 %v496, %v494
    %v677 = vpack.c.b16 %v499, %v497
    %v678 = vpack.c.b16 %v500, %v498
    %v679 = vpack.c.b16 %v503, %v501
    %v680 = vpack.c.b16 %v504, %v502
    %v681 = vpack.c.b16 %v507, %v505
    %v682 = vpack.c.b16 %v508, %v506
    %v683 = vpack.c.b16 %v511, %v509
    %v684 = vpack.c.b16 %v512, %v510
    %v685 = vpack.c.b16 %v515, %v513
    %v686 = vpack.c.b16 %v516, %v514
    %v687 = vpack.c.b16 %v519, %v517
    %v688 = vpack.c.b16 %v520, %v518
    %v689 = vpack.c.b16 %v523, %v521
    %v690 = vpack.c.b16 %v524, %v522
    %v691 = vpack.c.b16 %v527, %v525
    %v692 = vpack.c.b16 %v528, %v526
    %v693 = vpack.c.b16 %v531, %v529
    %v694 = vpack.c.b16 %v532, %v530
    %v695 = vpack.c.b16 %v535, %v533
    %v696 = vpack.c.b16 %v536, %v534
    %v697 = vpack.c.b16 %v539, %v537
    %v698 = vpack.c.b16 %v540, %v538
    %v699 = vpack.c.b16 %v543, %v541
    %v700 = vpack.c.b16 %v544, %v542
    %v701 = vpack.c.b16 %v547, %v545
    %v702 = vpack.c.b16 %v548, %v546
    %v703 = vpack.c.b16 %v551, %v549
    %v704 = vpack.c.b16 %v552, %v550
    %v705 = vpack.c.b16 %v555, %v553
    %v706 = vpack.c.b16 %v556, %v554
    %v707 = vpack.c.b16 %v559, %v557
    %v708 = vpack.c.b16 %v560, %v558
    %v709 = vpack.c.b16 %v563, %v561
    %v710 = vpack.c.b16 %v564, %v562
    %v711 = vpack.c.b16 %v567, %v565
    %v712 = vpack.c.b16 %v568, %v566
    %v713 = vpack.c.b16 %v571, %v569
    %v714 = vpack.c.b16 %v572, %v570
    %v715 = vpack.c.b16 %v575, %v573
    %v716 = vpack.c.b16 %v576, %v574
    %v717 = vpack.c.b16 %v579, %v577
    %v718 = vpack.c.b16 %v580, %v578
    %v719 = vpack.c.b16 %v583, %v581
    %v720 = vpack.c.b16 %v584, %v582
    %v721 = vpack.c.b16 %v587, %v585
    %v722 = vpack.c.b16 %v588, %v586
    %v723 = vpack.c.b16 %v591, %v589
    %v724 = vpack.c.b16 %v592, %v590
    %v725 = vpack.c.b16 %v595, %v593
    %v726 = vpack.c.b16 %v596, %v594
    %v727 = vpack.c.b16 %v599, %v597
    %v728 = vpack.c.b16 %v600, %v598
    %857 = vmatpush.bf16.msra.mxu0 %v615
    %858 = vmatpush.bf16.msra.mxu0 %v613
    %859 = vmatpush.bf16.msra.mxu0 %v611
    %860 = vmatpush.bf16.msra.mxu0 %v609
    %861 = vmatpush.bf16.msra.mxu0 %v607
    %862 = vmatpush.bf16.msra.mxu0 %v605
    %863 = vmatpush.bf16.msra.mxu0 %v603
    %864 = vmatpush.bf16.msra.mxu0 %v601
    %865 = vmatmul.bf16.gmra.mxu0 %v201
    %v866 = vpop.f32.mrf.mxu0
    %v867 = vadd.f32 %v185, %v866
    %v868 = vpop.f32.mrf.mxu0
    %869 = vdwg.mxu0
    %870 = vmatpush.bf16.msra.mxu0 %v631
    %871 = vmatpush.bf16.msra.mxu0 %v629
    %872 = vmatpush.bf16.msra.mxu0 %v627
    %873 = vmatpush.bf16.msra.mxu0 %v625
    %874 = vmatpush.bf16.msra.mxu0 %v623
    %875 = vmatpush.bf16.msra.mxu0 %v621
    %876 = vmatpush.bf16.msra.mxu0 %v619
    %877 = vmatpush.bf16.msra.mxu0 %v617
    %878 = vmatmul.bf16.gmra.mxu0 %v202
    %v879 = vpop.f32.mrf.mxu0
    %v880 = vadd.f32 %v867, %v879
    %v881 = vpop.f32.mrf.mxu0
    %882 = vdwg.mxu0
    %883 = vmatpush.bf16.msra.mxu0 %v647
    %884 = vmatpush.bf16.msra.mxu0 %v645
    %885 = vmatpush.bf16.msra.mxu0 %v643
    %886 = vmatpush.bf16.msra.mxu0 %v641
    %887 = vmatpush.bf16.msra.mxu0 %v639
    %888 = vmatpush.bf16.msra.mxu0 %v637
    %889 = vmatpush.bf16.msra.mxu0 %v635
    %890 = vmatpush.bf16.msra.mxu0 %v633
    %891 = vmatmul.bf16.gmra.mxu0 %v203
    %v892 = vpop.f32.mrf.mxu0
    %v893 = vadd.f32 %v880, %v892
    %v894 = vpop.f32.mrf.mxu0
    %895 = vdwg.mxu0
    %896 = vmatpush.bf16.msra.mxu0 %v663
    %897 = vmatpush.bf16.msra.mxu0 %v661
    %898 = vmatpush.bf16.msra.mxu0 %v659
    %899 = vmatpush.bf16.msra.mxu0 %v657
    %900 = vmatpush.bf16.msra.mxu0 %v655
    %901 = vmatpush.bf16.msra.mxu0 %v653
    %902 = vmatpush.bf16.msra.mxu0 %v651
    %903 = vmatpush.bf16.msra.mxu0 %v649
    %904 = vmatmul.bf16.gmra.mxu0 %v204
    %v905 = vpop.f32.mrf.mxu0
    %v906 = vadd.f32 %v893, %v905
    %v907 = vpop.f32.mrf.mxu0
    %908 = vdwg.mxu0
    %909 = vmatpush.bf16.msra.mxu0 %v679
    %910 = vmatpush.bf16.msra.mxu0 %v677
    %911 = vmatpush.bf16.msra.mxu0 %v675
    %912 = vmatpush.bf16.msra.mxu0 %v673
    %913 = vmatpush.bf16.msra.mxu0 %v671
    %914 = vmatpush.bf16.msra.mxu0 %v669
    %915 = vmatpush.bf16.msra.mxu0 %v667
    %916 = vmatpush.bf16.msra.mxu0 %v665
    %917 = vmatmul.bf16.gmra.mxu0 %v205
    %v918 = vpop.f32.mrf.mxu0
    %v919 = vadd.f32 %v906, %v918
    %v920 = vpop.f32.mrf.mxu0
    %921 = vdwg.mxu0
    %922 = vmatpush.bf16.msra.mxu0 %v695
    %923 = vmatpush.bf16.msra.mxu0 %v693
    %924 = vmatpush.bf16.msra.mxu0 %v691
    %925 = vmatpush.bf16.msra.mxu0 %v689
    %926 = vmatpush.bf16.msra.mxu0 %v687
    %927 = vmatpush.bf16.msra.mxu0 %v685
    %928 = vmatpush.bf16.msra.mxu0 %v683
    %929 = vmatpush.bf16.msra.mxu0 %v681
    %930 = vmatmul.bf16.gmra.mxu0 %v206
    %v931 = vpop.f32.mrf.mxu0
    %v932 = vadd.f32 %v919, %v931
    %v933 = vpop.f32.mrf.mxu0
    %934 = vdwg.mxu0
    %935 = vmatpush.bf16.msra.mxu0 %v711
    %936 = vmatpush.bf16.msra.mxu0 %v709
    %937 = vmatpush.bf16.msra.mxu0 %v707
    %938 = vmatpush.bf16.msra.mxu0 %v705
    %939 = vmatpush.bf16.msra.mxu0 %v703
    %940 = vmatpush.bf16.msra.mxu0 %v701
    %941 = vmatpush.bf16.msra.mxu0 %v699
    %942 = vmatpush.bf16.msra.mxu0 %v697
    %943 = vmatmul.bf16.gmra.mxu0 %v207
    %v944 = vpop.f32.mrf.mxu0
    %v945 = vadd.f32 %v932, %v944
    %v946 = vpop.f32.mrf.mxu0
    %947 = vdwg.mxu0
    %948 = vmatpush.bf16.msra.mxu0 %v727
    %949 = vmatpush.bf16.msra.mxu0 %v725
    %950 = vmatpush.bf16.msra.mxu0 %v723
    %951 = vmatpush.bf16.msra.mxu0 %v721
    %952 = vmatpush.bf16.msra.mxu0 %v719
    %953 = vmatpush.bf16.msra.mxu0 %v717
    %954 = vmatpush.bf16.msra.mxu0 %v715
    %955 = vmatpush.bf16.msra.mxu0 %v713
    %956 = vmatmul.bf16.gmra.mxu0 %v208
    %v957 = vpop.f32.mrf.mxu0
    %v958 = vadd.f32 %v945, %v957
    %v959 = vpop.f32.mrf.mxu0
    %960 = vdwg.mxu0
    %961 = vmatpush.bf16.msra.mxu0 %v616
    %962 = vmatpush.bf16.msra.mxu0 %v614
    %963 = vmatpush.bf16.msra.mxu0 %v612
    %964 = vmatpush.bf16.msra.mxu0 %v610
    %965 = vmatpush.bf16.msra.mxu0 %v608
    %966 = vmatpush.bf16.msra.mxu0 %v606
    %967 = vmatpush.bf16.msra.mxu0 %v604
    %968 = vmatpush.bf16.msra.mxu0 %v602
    %969 = vmatmul.bf16.gmra.mxu0 %v201
    %v970 = vpop.f32.mrf.mxu0
    %v971 = vadd.f32 %v186, %v970
    %v972 = vpop.f32.mrf.mxu0
    %973 = vdwg.mxu0
    %974 = vmatpush.bf16.msra.mxu0 %v632
    %975 = vmatpush.bf16.msra.mxu0 %v630
    %976 = vmatpush.bf16.msra.mxu0 %v628
    %977 = vmatpush.bf16.msra.mxu0 %v626
    %978 = vmatpush.bf16.msra.mxu0 %v624
    %979 = vmatpush.bf16.msra.mxu0 %v622
    %980 = vmatpush.bf16.msra.mxu0 %v620
    %981 = vmatpush.bf16.msra.mxu0 %v618
    %982 = vmatmul.bf16.gmra.mxu0 %v202
    %v983 = vpop.f32.mrf.mxu0
    %v984 = vadd.f32 %v971, %v983
    %v985 = vpop.f32.mrf.mxu0
    %986 = vdwg.mxu0
    %987 = vmatpush.bf16.msra.mxu0 %v648
    %988 = vmatpush.bf16.msra.mxu0 %v646
    %989 = vmatpush.bf16.msra.mxu0 %v644
    %990 = vmatpush.bf16.msra.mxu0 %v642
    %991 = vmatpush.bf16.msra.mxu0 %v640
    %992 = vmatpush.bf16.msra.mxu0 %v638
    %993 = vmatpush.bf16.msra.mxu0 %v636
    %994 = vmatpush.bf16.msra.mxu0 %v634
    %995 = vmatmul.bf16.gmra.mxu0 %v203
    %v996 = vpop.f32.mrf.mxu0
    %v997 = vadd.f32 %v984, %v996
    %v998 = vpop.f32.mrf.mxu0
    %999 = vdwg.mxu0
    %1000 = vmatpush.bf16.msra.mxu0 %v664
    %1001 = vmatpush.bf16.msra.mxu0 %v662
    %1002 = vmatpush.bf16.msra.mxu0 %v660
    %1003 = vmatpush.bf16.msra.mxu0 %v658
    %1004 = vmatpush.bf16.msra.mxu0 %v656
    %1005 = vmatpush.bf16.msra.mxu0 %v654
    %1006 = vmatpush.bf16.msra.mxu0 %v652
    %1007 = vmatpush.bf16.msra.mxu0 %v650
    %1008 = vmatmul.bf16.gmra.mxu0 %v204
    %v1009 = vpop.f32.mrf.mxu0
    %v1010 = vadd.f32 %v997, %v1009
    %v1011 = vpop.f32.mrf.mxu0
    %1012 = vdwg.mxu0
    %1013 = vmatpush.bf16.msra.mxu0 %v680
    %1014 = vmatpush.bf16.msra.mxu0 %v678
    %1015 = vmatpush.bf16.msra.mxu0 %v676
    %1016 = vmatpush.bf16.msra.mxu0 %v674
    %1017 = vmatpush.bf16.msra.mxu0 %v672
    %1018 = vmatpush.bf16.msra.mxu0 %v670
    %1019 = vmatpush.bf16.msra.mxu0 %v668
    %1020 = vmatpush.bf16.msra.mxu0 %v666
    %1021 = vmatmul.bf16.gmra.mxu0 %v205
    %v1022 = vpop.f32.mrf.mxu0
    %v1023 = vadd.f32 %v1010, %v1022
    %v1024 = vpop.f32.mrf.mxu0
    %1025 = vdwg.mxu0
    %1026 = vmatpush.bf16.msra.mxu0 %v696
    %1027 = vmatpush.bf16.msra.mxu0 %v694
    %1028 = vmatpush.bf16.msra.mxu0 %v692
    %1029 = vmatpush.bf16.msra.mxu0 %v690
    %1030 = vmatpush.bf16.msra.mxu0 %v688
    %1031 = vmatpush.bf16.msra.mxu0 %v686
    %1032 = vmatpush.bf16.msra.mxu0 %v684
    %1033 = vmatpush.bf16.msra.mxu0 %v682
    %1034 = vmatmul.bf16.gmra.mxu0 %v206
    %v1035 = vpop.f32.mrf.mxu0
    %v1036 = vadd.f32 %v1023, %v1035
    %v1037 = vpop.f32.mrf.mxu0
    %1038 = vdwg.mxu0
    %1039 = vmatpush.bf16.msra.mxu0 %v712
    %1040 = vmatpush.bf16.msra.mxu0 %v710
    %1041 = vmatpush.bf16.msra.mxu0 %v708
    %1042 = vmatpush.bf16.msra.mxu0 %v706
    %1043 = vmatpush.bf16.msra.mxu0 %v704
    %1044 = vmatpush.bf16.msra.mxu0 %v702
    %1045 = vmatpush.bf16.msra.mxu0 %v700
    %1046 = vmatpush.bf16.msra.mxu0 %v698
    %1047 = vmatmul.bf16.gmra.mxu0 %v207
    %v1048 = vpop.f32.mrf.mxu0
    %v1049 = vadd.f32 %v1036, %v1048
    %v1050 = vpop.f32.mrf.mxu0
    %1051 = vdwg.mxu0
    %1052 = vmatpush.bf16.msra.mxu0 %v728
    %1053 = vmatpush.bf16.msra.mxu0 %v726
    %1054 = vmatpush.bf16.msra.mxu0 %v724
    %1055 = vmatpush.bf16.msra.mxu0 %v722
    %1056 = vmatpush.bf16.msra.mxu0 %v720
    %1057 = vmatpush.bf16.msra.mxu0 %v718
    %1058 = vmatpush.bf16.msra.mxu0 %v716
    %1059 = vmatpush.bf16.msra.mxu0 %v714
    %1060 = vmatmul.bf16.gmra.mxu0 %v208
    %v1061 = vpop.f32.mrf.mxu0
    %v1062 = vadd.f32 %v1049, %v1061
    %v1063 = vpop.f32.mrf.mxu0
    %1064 = vdwg.mxu0
    %v1065 = vmax.f32 %v958, 0.0
    %v1066 = vmax.f32 %v1062, 0.0
    %v1067 = vld [vmem:[%s3] sm:$0x3]
    %v1069 = vperm.slane %v1067, 0
    %v1070 = vperm.slane %v1067, 1
    %v1073 = vmul.f32 %v1065, %v1069
    %v1074 = vmul.f32 %v1066, %v1070
    %v1075 = vadd.f32 %v1073, %v1074
    %1076 = vadd.xlane.f32.xlu0 %v1075
    %v1077 = vpop.xlane.xlu0 %1076
    %s1078 = sld [smem:[#allocation2]]
    %v1079 = vstv %s1078
    %v1080 = vadd.f32 %v1077, %v1079
    %v1081 = vxor.u32 %v1080, 2147483648
    %v1082 = vmul.f32 %v1081, 1.442695
    %v1083 = vpow.pop %v1082
    %v1084 = vadd.f32 %v1083, 1.0
    %v1085 = vrcp.pop %v1084
    %v1086 = vmul.f32 %v1084, %v1085
    %v1087 = vsub.f32 1.0, %v1086
    %v1088 = vmul.f32 %v1085, %v1087
    %v1089 = vadd.f32 %v1085, %v1088
    %vm1090 = vweird.f32 %v1084
    %vm1091 = vweird.f32 %v1085
    %vm1092 = vmor %vm1090, %vm1091
    %v1093 = vsel %vm1092, %v1085, %v1089
    %v1094 = vand.u32 2147483647, %v1084
    %vm1095 = vcmp.eq.f32.partialorder %v1094, 8.507059e+37
    %v1096 = vand.u32 %v1084, 2147483648
    %v1097 = vor.u32 1.1754944e-38, %v1096
    %v1098 = vsel %vm1095, %v1097, %v1093
    %v1099 = vmul.f32 1.0, %v1098
    %vm1100 = vcmask 7168
    %1101 = vst.msk [vmem:[%s5] sm:$0xff] %vm1100, %v1099
    // Predicated region
    $region30: #{tpu_custom_call.1} parent=1 // pred_check
      _
    $region31: #{tpu_custom_call.1} parent=1 // pred_check_branch
      %1103 = sbr.rel (0) target = $region33
    $region32: #{tpu_custom_call.1} parent=1 // pred_region
      _
    $region33: #{tpu_custom_call.1} parent=1 // pred_fallthru
      _
    // Predicated region
    $region34: #{tpu_custom_call.1} parent=1 // pred_check
      _
    $region35: #{tpu_custom_call.1} parent=1 // pred_check_branch
      %1105 = sbr.rel (0) target = $region37
    $region36: #{tpu_custom_call.1} parent=1 // pred_region
      _
    $region37: #{tpu_custom_call.1} parent=1 // pred_fallthru
      _
    %1106 = vsyncpa [#allocation4], 1
    %1107 = vsyncpa [#allocation6], 1

</llo_original>
